<compile_context>
chip_gen: v6e
topology: v6e:2x2x1
jax: 0.10.0
libtpu: 0.0.40
codegen_flags: <defaults>
</compile_context>

<pallas_src>
import functools

import jax
import jax.numpy as jnp
import numpy as np
from jax.experimental import pallas as pl
from jax.experimental.pallas import tpu as pltpu

KERNEL_SIZE = 3
PAD = 1  # padding=1 for kernel_size=3


def _spatial_attention_kernel(w_ref, hwidx_ref, x_ref, o_ref, sum_ref, max_ref,
                              *, D, H, W, c_chunk):
    # w_ref     : SMEM f32[54]   flattened conv weight, index c*27+kd*9+kh*3+kw
    #                            (avg-channel weights already scaled by 1/C)
    # hwidx_ref : VMEM (2, D, H*W) int32   [h index plane, w index plane]
    # x_ref     : VMEM (1, Cc, D, H*W)     one channel-chunk of one batch elem
    # o_ref     : VMEM (1, D, H*W)         attention map (written on last C step)
    # sum_ref   : VMEM (D, H*W) f32        running channel sum  (persists)
    # max_ref   : VMEM (D, H*W) f32        running channel max  (persists)
    HW = H * W
    c_step = pl.program_id(1)
    num_c = pl.num_programs(1)

    # ---- streamed channel reduction: per-channel loop keeps live ranges small
    x0 = x_ref[0, 0].astype(jnp.float32)
    part_sum = x0
    part_max = x0
    for c in range(1, c_chunk):
        xc = x_ref[0, c].astype(jnp.float32)
        part_sum = part_sum + xc
        part_max = jnp.maximum(part_max, xc)

    @pl.when(c_step == 0)
    def _init():
        sum_ref[...] = part_sum
        max_ref[...] = part_max

    @pl.when(c_step != 0)
    def _accumulate():
        sum_ref[...] = sum_ref[...] + part_sum
        max_ref[...] = jnp.maximum(max_ref[...], part_max)

    # ---- finalize: 3x3x3 conv (2 in-ch -> 1 out-ch, no bias) + sigmoid ------
    @pl.when(c_step == num_c - 1)
    def _finalize():
        s_plane = sum_ref[...]          # channel sum (1/C folded into weights)
        m_plane = max_ref[...]

        # Hoist all 54 scalar weight reads above the unrolled tap loops.
        wts = [w_ref[i] for i in range(2 * 27)]

        h_idx = hwidx_ref[0]            # (D, HW) int32, h position per lane
        w_idx = hwidx_ref[1]            # (D, HW) int32, w position per lane

        # Lane (h, w) shifts: computed once, masked once, reused for all kd.
        y = [None, None, None]          # per-kd combined planes
        for oh in (-1, 0, 1):
            for ow in (-1, 0, 1):
                off = oh * W + ow       # flat (h, w) shift in lanes
                if off == 0:
                    a_s, m_s = s_plane, m_plane
                else:
                    sp = (-off) % HW
                    a_s = pltpu.roll(s_plane, sp, axis=1)   # XLU lane roll
                    m_s = pltpu.roll(m_plane, sp, axis=1)
                    # Edge mask generated per-(oh,ow) to bound vreg pressure;
                    # masking BEFORE the kd combine is valid because the mask
                    # only depends on the lane index, preserved by sublane rolls.
                    ok = None
                    if oh == -1:
                        ok = h_idx >= 1
                    elif oh == 1:
                        ok = h_idx <= H - 2
                    if ow == -1:
                        okw = w_idx >= 1
                        ok = okw if ok is None else jnp.logical_and(ok, okw)
                    elif ow == 1:
                        okw = w_idx <= W - 2
                        ok = okw if ok is None else jnp.logical_and(ok, okw)
                    a_s = jnp.where(ok, a_s, 0.0)
                    m_s = jnp.where(ok, m_s, 0.0)
                kh = oh + PAD
                kw = ow + PAD
                for kd in range(KERNEL_SIZE):
                    t = kd * 9 + kh * 3 + kw
                    contrib = wts[t] * a_s + wts[27 + t] * m_s
                    y[kd] = contrib if y[kd] is None else y[kd] + contrib

        # Depth taps: only 2 sublane rolls + 2 masked adds.
        d_idx = jax.lax.broadcasted_iota(jnp.int32, (D, HW), 0)
        acc = y[1]                                          # kd=1, od=0
        y0r = pltpu.roll(y[0], 1 % D, axis=0)               # reads depth d-1
        acc = acc + jnp.where(d_idx >= 1, y0r, 0.0)
        y2r = pltpu.roll(y[2], (D - 1) % D, axis=0)         # reads depth d+1
        acc = acc + jnp.where(d_idx <= D - 2, y2r, 0.0)

        o_ref[0] = jax.nn.sigmoid(acc).astype(o_ref.dtype)


def spatial_attention(x, weight, *, c_chunk=None, vmem_limit_bytes=None):
    """x: (N, C, D, H, W); weight: (1, 2, 3, 3, 3). Returns (N, 1, D, H, W)."""
    N, C, D, H, W = x.shape
    HW = H * W
    itemsize = jnp.dtype(x.dtype).itemsize

    # Generation-aware block sizing: v5e/v6e have 128 MiB VMEM, v7x has 64 MiB.
    try:
        vmem_cap = int(pltpu.get_tpu_info().vmem_capacity_bytes)
    except Exception:  # conservative fallback if the query is unavailable
        vmem_cap = 64 * 1024 * 1024
    big_vmem = vmem_cap >= 100 * 1024 * 1024
    if vmem_limit_bytes is None:
        vmem_limit_bytes = (100 if big_vmem else 56) * 1024 * 1024
    if c_chunk is None:
        # Per-input-buffer DMA budget; cap channel count to bound trace size.
        budget = (28 if big_vmem else 14) * 1024 * 1024
        max_cc = int(min(max(budget // (D * HW * itemsize), 1), 256))
        c_chunk = 1
        for cand in range(1, C + 1):
            if C % cand == 0 and cand <= max_cc:
                c_chunk = cand
    assert C % c_chunk == 0, "c_chunk must divide C"
    num_c = C // c_chunk

    x_flat = x.reshape(N, C, D, HW)                    # lane-dense minor dim

    # Flatten conv weights and fold the 1/C channel-mean scale into the
    # avg-channel taps (the conv is linear, so numerics are identical).
    w2 = weight.astype(jnp.float32).reshape(2, 27)
    w_flat = jnp.concatenate([w2[0] * (1.0 / C), w2[1]])   # (54,)

    # Precomputed h/w index planes: no integer //W or %W inside the kernel.
    h_idx = jax.lax.broadcasted_iota(jnp.int32, (D, H, W), 1).reshape(D, HW)
    w_idx = jax.lax.broadcasted_iota(jnp.int32, (D, H, W), 2).reshape(D, HW)
    hw_idx = jnp.stack([h_idx, w_idx], axis=0)          # (2, D, HW) int32

    kernel = functools.partial(_spatial_attention_kernel,
                               D=D, H=H, W=W, c_chunk=c_chunk)

    cost = pl.CostEstimate(
        flops=N * D * HW * (2 * C + 140),
        transcendentals=N * D * HW,
        bytes_accessed=(N * C * D * HW + N * D * HW) * itemsize
        + hw_idx.size * 4 + w_flat.size * 4,
    )

    out_flat = pl.pallas_call(
        kernel,
        out_shape=jax.ShapeDtypeStruct((N, D, HW), x.dtype),
        grid_spec=pltpu.PrefetchScalarGridSpec(
            num_scalar_prefetch=0,
            grid=(N, num_c),
            in_specs=[
                pl.BlockSpec(memory_space=pltpu.MemorySpace.SMEM),            # weights
                pl.BlockSpec((2, D, HW), lambda n, c: (0, 0, 0)),             # h/w idx
                pl.BlockSpec((1, c_chunk, D, HW), lambda n, c: (n, c, 0, 0)),  # x chunk
            ],
            out_specs=pl.BlockSpec((1, D, HW), lambda n, c: (n, 0, 0)),
            scratch_shapes=[
                pltpu.VMEM((D, HW), jnp.float32),   # running channel sum
                pltpu.VMEM((D, HW), jnp.float32),   # running channel max
            ],
        ),
        compiler_params=pltpu.CompilerParams(
            dimension_semantics=("parallel", "arbitrary"),
            vmem_limit_bytes=vmem_limit_bytes,
        ),
        cost_estimate=cost,
    )(w_flat, hw_idx, x_flat)

    return out_flat.reshape(N, 1, D, H, W)


def _reference(x, weight):
    """Pure-JAX reference replicating the PyTorch forward exactly."""
    avg_out = jnp.mean(x, axis=1, keepdims=True)
    max_out = jnp.max(x, axis=1, keepdims=True)
    pooled = jnp.concatenate([avg_out, max_out], axis=1)        # (N,2,D,H,W)
    padded = jnp.pad(
        pooled, ((0, 0), (0, 0), (PAD, PAD), (PAD, PAD), (PAD, PAD)))
    N, _, D, H, W = x.shape
    out = jnp.zeros((N, 1, D, H, W), jnp.float32)
    for c in range(2):
        for kd in range(KERNEL_SIZE):
            for kh in range(KERNEL_SIZE):
                for kw in range(KERNEL_SIZE):
                    tap = padded[:, c, kd:kd + D, kh:kh + H, kw:kw + W]
                    out = out + weight[0, c, kd, kh, kw] * tap[:, None]
    return jax.nn.sigmoid(out)


if __name__ == "__main__":
    key = jax.random.PRNGKey(0)
    kx, kw = jax.random.split(key)

    # Small NCDHW input: batch=2, channels=8, D=8, H=8, W=16  (H*W = 128 lanes).
    N, C, D, H, W = 2, 8, 8, 8, 16
    x = jax.random.normal(kx, (N, C, D, H, W), dtype=jnp.float32)

    # Deterministic conv weight, shape (out=1, in=2, 3, 3, 3), Kaiming-ish scale.
    fan_in = 2 * KERNEL_SIZE ** 3
    weight = jax.random.normal(kw, (1, 2, 3, 3, 3), dtype=jnp.float32) / np.sqrt(fan_in)

    # c_chunk=4 -> two reduction steps, exercising the streamed-C accumulator path.
    out = spatial_attention(x, weight, c_chunk=4)
    out = jax.block_until_ready(out)

    ref = jax.block_until_ready(_reference(x, weight))
    np.testing.assert_allclose(np.asarray(out), np.asarray(ref), atol=1e-4, rtol=1e-4)

    print("KERNEL_OK")
</pallas_src>

<mosaic_0001>
module attributes {stable_mosaic.version = 11 : i64} {
  func.func @_spatial_attention_kernel(%arg0: i32, %arg1: i32, %arg2: memref<54xf32, #tpu.memory_space<smem>>, %arg3: memref<2x8x128xi32, #tpu.memory_space<vmem>>, %arg4: memref<1x4x8x128xf32, #tpu.memory_space<vmem>>, %arg5: memref<1x8x128xf32, #tpu.memory_space<vmem>>, %arg6: memref<8x128xf32, #tpu.memory_space<vmem>>, %arg7: memref<8x128xf32, #tpu.memory_space<vmem>>) attributes {dimension_semantics = [#tpu.dimension_semantics<parallel>, #tpu.dimension_semantics<arbitrary>], iteration_bounds = array<i64: 2, 2>, scalar_prefetch = 0 : i64, scratch_operands = 2 : i64, tpu.core_type = #tpu.core_type<tc>, window_params = [{transform_indices = @transform_0, window_bounds = array<i64: 54>}, {pipeline_mode = #tpu.pipeline_mode<synchronous>, transform_indices = @transform_1, window_bounds = array<i64: 2, 8, 128>}, {transform_indices = @transform_2, window_bounds = array<i64: 1, 4, 8, 128>}, {transform_indices = @transform_3, window_bounds = array<i64: 1, 8, 128>}]} {
    %c0 = arith.constant 0 : index
    %c0_0 = arith.constant 0 : index
    %c0_1 = arith.constant 0 : index
    %c0_2 = arith.constant 0 : index
    %0 = vector.load %arg4[%c0, %c0_0, %c0_1, %c0_2] : memref<1x4x8x128xf32, #tpu.memory_space<vmem>>, vector<1x1x8x128xf32>
    %1 = vector.shape_cast %0 : vector<1x1x8x128xf32> to vector<8x128xf32>
    %c0_3 = arith.constant 0 : index
    %c1 = arith.constant 1 : index
    %c0_4 = arith.constant 0 : index
    %c0_5 = arith.constant 0 : index
    %2 = vector.load %arg4[%c0_3, %c1, %c0_4, %c0_5] : memref<1x4x8x128xf32, #tpu.memory_space<vmem>>, vector<1x1x8x128xf32>
    %3 = vector.shape_cast %2 : vector<1x1x8x128xf32> to vector<8x128xf32>
    %4 = arith.addf %1, %3 : vector<8x128xf32>
    %5 = arith.maximumf %1, %3 : vector<8x128xf32>
    %c0_6 = arith.constant 0 : index
    %c2 = arith.constant 2 : index
    %c0_7 = arith.constant 0 : index
    %c0_8 = arith.constant 0 : index
    %6 = vector.load %arg4[%c0_6, %c2, %c0_7, %c0_8] : memref<1x4x8x128xf32, #tpu.memory_space<vmem>>, vector<1x1x8x128xf32>
    %7 = vector.shape_cast %6 : vector<1x1x8x128xf32> to vector<8x128xf32>
    %8 = arith.addf %4, %7 : vector<8x128xf32>
    %9 = arith.maximumf %5, %7 : vector<8x128xf32>
    %c0_9 = arith.constant 0 : index
    %c3 = arith.constant 3 : index
    %c0_10 = arith.constant 0 : index
    %c0_11 = arith.constant 0 : index
    %10 = vector.load %arg4[%c0_9, %c3, %c0_10, %c0_11] : memref<1x4x8x128xf32, #tpu.memory_space<vmem>>, vector<1x1x8x128xf32>
    %11 = vector.shape_cast %10 : vector<1x1x8x128xf32> to vector<8x128xf32>
    %12 = arith.addf %8, %11 : vector<8x128xf32>
    %13 = arith.maximumf %9, %11 : vector<8x128xf32>
    %c0_i32 = arith.constant 0 : i32
    %14 = arith.cmpi eq, %arg1, %c0_i32 : i32
    %15 = arith.extui %14 : i1 to i32
    %c0_i32_12 = arith.constant 0 : i32
    %16 = arith.cmpi ne, %15, %c0_i32_12 : i32
    scf.if %16 {
      %c0_16 = arith.constant 0 : index
      %c0_17 = arith.constant 0 : index
      %23 = vector.load %arg6[%c0_16, %c0_17] : memref<8x128xf32, #tpu.memory_space<vmem>>, vector<8x128xf32>
      tpu.vector_store %arg6[%c0_16, %c0_17], %12 {strides = array<i32>} : memref<8x128xf32, #tpu.memory_space<vmem>>, vector<8x128xf32>,
      %c0_18 = arith.constant 0 : index
      %c0_19 = arith.constant 0 : index
      %24 = vector.load %arg7[%c0_18, %c0_19] : memref<8x128xf32, #tpu.memory_space<vmem>>, vector<8x128xf32>
      tpu.vector_store %arg7[%c0_18, %c0_19], %13 {strides = array<i32>} : memref<8x128xf32, #tpu.memory_space<vmem>>, vector<8x128xf32>,
    } else {
    }
    %c0_i32_13 = arith.constant 0 : i32
    %17 = arith.cmpi ne, %arg1, %c0_i32_13 : i32
    %18 = arith.extui %17 : i1 to i32
    %c0_i32_14 = arith.constant 0 : i32
    %19 = arith.cmpi ne, %18, %c0_i32_14 : i32
    scf.if %19 {
      %c0_16 = arith.constant 0 : index
      %c0_17 = arith.constant 0 : index
      %23 = vector.load %arg6[%c0_16, %c0_17] : memref<8x128xf32, #tpu.memory_space<vmem>>, vector<8x128xf32>
      %24 = arith.addf %23, %12 : vector<8x128xf32>
      %c0_18 = arith.constant 0 : index
      %c0_19 = arith.constant 0 : index
      %25 = vector.load %arg6[%c0_18, %c0_19] : memref<8x128xf32, #tpu.memory_space<vmem>>, vector<8x128xf32>
      tpu.vector_store %arg6[%c0_18, %c0_19], %24 {strides = array<i32>} : memref<8x128xf32, #tpu.memory_space<vmem>>, vector<8x128xf32>,
      %c0_20 = arith.constant 0 : index
      %c0_21 = arith.constant 0 : index
      %26 = vector.load %arg7[%c0_20, %c0_21] : memref<8x128xf32, #tpu.memory_space<vmem>>, vector<8x128xf32>
      %27 = arith.maximumf %26, %13 : vector<8x128xf32>
      %c0_22 = arith.constant 0 : index
      %c0_23 = arith.constant 0 : index
      %28 = vector.load %arg7[%c0_22, %c0_23] : memref<8x128xf32, #tpu.memory_space<vmem>>, vector<8x128xf32>
      tpu.vector_store %arg7[%c0_22, %c0_23], %27 {strides = array<i32>} : memref<8x128xf32, #tpu.memory_space<vmem>>, vector<8x128xf32>,
    } else {
    }
    %c1_i32 = arith.constant 1 : i32
    %20 = arith.cmpi eq, %arg1, %c1_i32 : i32
    %21 = arith.extui %20 : i1 to i32
    %c0_i32_15 = arith.constant 0 : i32
    %22 = arith.cmpi ne, %21, %c0_i32_15 : i32
    scf.if %22 {
      %c0_16 = arith.constant 0 : index
      %c0_17 = arith.constant 0 : index
      %23 = vector.load %arg6[%c0_16, %c0_17] : memref<8x128xf32, #tpu.memory_space<vmem>>, vector<8x128xf32>
      %c0_18 = arith.constant 0 : index
      %c0_19 = arith.constant 0 : index
      %24 = vector.load %arg7[%c0_18, %c0_19] : memref<8x128xf32, #tpu.memory_space<vmem>>, vector<8x128xf32>
      %c0_20 = arith.constant 0 : index
      %25 = memref.load %arg2[%c0_20] : memref<54xf32, #tpu.memory_space<smem>>
      %c1_21 = arith.constant 1 : index
      %26 = memref.load %arg2[%c1_21] : memref<54xf32, #tpu.memory_space<smem>>
      %c2_22 = arith.constant 2 : index
      %27 = memref.load %arg2[%c2_22] : memref<54xf32, #tpu.memory_space<smem>>
      %c3_23 = arith.constant 3 : index
      %28 = memref.load %arg2[%c3_23] : memref<54xf32, #tpu.memory_space<smem>>
      %c4 = arith.constant 4 : index
      %29 = memref.load %arg2[%c4] : memref<54xf32, #tpu.memory_space<smem>>
      %c5 = arith.constant 5 : index
      %30 = memref.load %arg2[%c5] : memref<54xf32, #tpu.memory_space<smem>>
      %c6 = arith.constant 6 : index
      %31 = memref.load %arg2[%c6] : memref<54xf32, #tpu.memory_space<smem>>
      %c7 = arith.constant 7 : index
      %32 = memref.load %arg2[%c7] : memref<54xf32, #tpu.memory_space<smem>>
      %c8 = arith.constant 8 : index
      %33 = memref.load %arg2[%c8] : memref<54xf32, #tpu.memory_space<smem>>
      %c9 = arith.constant 9 : index
      %34 = memref.load %arg2[%c9] : memref<54xf32, #tpu.memory_space<smem>>
      %c10 = arith.constant 10 : index
      %35 = memref.load %arg2[%c10] : memref<54xf32, #tpu.memory_space<smem>>
      %c11 = arith.constant 11 : index
      %36 = memref.load %arg2[%c11] : memref<54xf32, #tpu.memory_space<smem>>
      %c12 = arith.constant 12 : index
      %37 = memref.load %arg2[%c12] : memref<54xf32, #tpu.memory_space<smem>>
      %c13 = arith.constant 13 : index
      %38 = memref.load %arg2[%c13] : memref<54xf32, #tpu.memory_space<smem>>
      %c14 = arith.constant 14 : index
      %39 = memref.load %arg2[%c14] : memref<54xf32, #tpu.memory_space<smem>>
      %c15 = arith.constant 15 : index
      %40 = memref.load %arg2[%c15] : memref<54xf32, #tpu.memory_space<smem>>
      %c16 = arith.constant 16 : index
      %41 = memref.load %arg2[%c16] : memref<54xf32, #tpu.memory_space<smem>>
      %c17 = arith.constant 17 : index
      %42 = memref.load %arg2[%c17] : memref<54xf32, #tpu.memory_space<smem>>
      %c18 = arith.constant 18 : index
      %43 = memref.load %arg2[%c18] : memref<54xf32, #tpu.memory_space<smem>>
      %c19 = arith.constant 19 : index
      %44 = memref.load %arg2[%c19] : memref<54xf32, #tpu.memory_space<smem>>
      %c20 = arith.constant 20 : index
      %45 = memref.load %arg2[%c20] : memref<54xf32, #tpu.memory_space<smem>>
      %c21 = arith.constant 21 : index
      %46 = memref.load %arg2[%c21] : memref<54xf32, #tpu.memory_space<smem>>
      %c22 = arith.constant 22 : index
      %47 = memref.load %arg2[%c22] : memref<54xf32, #tpu.memory_space<smem>>
      %c23 = arith.constant 23 : index
      %48 = memref.load %arg2[%c23] : memref<54xf32, #tpu.memory_space<smem>>
      %c24 = arith.constant 24 : index
      %49 = memref.load %arg2[%c24] : memref<54xf32, #tpu.memory_space<smem>>
      %c25 = arith.constant 25 : index
      %50 = memref.load %arg2[%c25] : memref<54xf32, #tpu.memory_space<smem>>
      %c26 = arith.constant 26 : index
      %51 = memref.load %arg2[%c26] : memref<54xf32, #tpu.memory_space<smem>>
      %c27 = arith.constant 27 : index
      %52 = memref.load %arg2[%c27] : memref<54xf32, #tpu.memory_space<smem>>
      %c28 = arith.constant 28 : index
      %53 = memref.load %arg2[%c28] : memref<54xf32, #tpu.memory_space<smem>>
      %c29 = arith.constant 29 : index
      %54 = memref.load %arg2[%c29] : memref<54xf32, #tpu.memory_space<smem>>
      %c30 = arith.constant 30 : index
      %55 = memref.load %arg2[%c30] : memref<54xf32, #tpu.memory_space<smem>>
      %c31 = arith.constant 31 : index
      %56 = memref.load %arg2[%c31] : memref<54xf32, #tpu.memory_space<smem>>
      %c32 = arith.constant 32 : index
      %57 = memref.load %arg2[%c32] : memref<54xf32, #tpu.memory_space<smem>>
      %c33 = arith.constant 33 : index
      %58 = memref.load %arg2[%c33] : memref<54xf32, #tpu.memory_space<smem>>
      %c34 = arith.constant 34 : index
      %59 = memref.load %arg2[%c34] : memref<54xf32, #tpu.memory_space<smem>>
      %c35 = arith.constant 35 : index
      %60 = memref.load %arg2[%c35] : memref<54xf32, #tpu.memory_space<smem>>
      %c36 = arith.constant 36 : index
      %61 = memref.load %arg2[%c36] : memref<54xf32, #tpu.memory_space<smem>>
      %c37 = arith.constant 37 : index
      %62 = memref.load %arg2[%c37] : memref<54xf32, #tpu.memory_space<smem>>
      %c38 = arith.constant 38 : index
      %63 = memref.load %arg2[%c38] : memref<54xf32, #tpu.memory_space<smem>>
      %c39 = arith.constant 39 : index
      %64 = memref.load %arg2[%c39] : memref<54xf32, #tpu.memory_space<smem>>
      %c40 = arith.constant 40 : index
      %65 = memref.load %arg2[%c40] : memref<54xf32, #tpu.memory_space<smem>>
      %c41 = arith.constant 41 : index
      %66 = memref.load %arg2[%c41] : memref<54xf32, #tpu.memory_space<smem>>
      %c42 = arith.constant 42 : index
      %67 = memref.load %arg2[%c42] : memref<54xf32, #tpu.memory_space<smem>>
      %c43 = arith.constant 43 : index
      %68 = memref.load %arg2[%c43] : memref<54xf32, #tpu.memory_space<smem>>
      %c44 = arith.constant 44 : index
      %69 = memref.load %arg2[%c44] : memref<54xf32, #tpu.memory_space<smem>>
      %c45 = arith.constant 45 : index
      %70 = memref.load %arg2[%c45] : memref<54xf32, #tpu.memory_space<smem>>
      %c46 = arith.constant 46 : index
      %71 = memref.load %arg2[%c46] : memref<54xf32, #tpu.memory_space<smem>>
      %c47 = arith.constant 47 : index
      %72 = memref.load %arg2[%c47] : memref<54xf32, #tpu.memory_space<smem>>
      %c48 = arith.constant 48 : index
      %73 = memref.load %arg2[%c48] : memref<54xf32, #tpu.memory_space<smem>>
      %c49 = arith.constant 49 : index
      %74 = memref.load %arg2[%c49] : memref<54xf32, #tpu.memory_space<smem>>
      %c50 = arith.constant 50 : index
      %75 = memref.load %arg2[%c50] : memref<54xf32, #tpu.memory_space<smem>>
      %c51 = arith.constant 51 : index
      %76 = memref.load %arg2[%c51] : memref<54xf32, #tpu.memory_space<smem>>
      %c52 = arith.constant 52 : index
      %77 = memref.load %arg2[%c52] : memref<54xf32, #tpu.memory_space<smem>>
      %c53 = arith.constant 53 : index
      %78 = memref.load %arg2[%c53] : memref<54xf32, #tpu.memory_space<smem>>
      %c0_24 = arith.constant 0 : index
      %c0_25 = arith.constant 0 : index
      %c0_26 = arith.constant 0 : index
      %79 = vector.load %arg3[%c0_24, %c0_25, %c0_26] : memref<2x8x128xi32, #tpu.memory_space<vmem>>, vector<1x8x128xi32>
      %80 = vector.shape_cast %79 : vector<1x8x128xi32> to vector<8x128xi32>
      %c1_27 = arith.constant 1 : index
      %c0_28 = arith.constant 0 : index
      %c0_29 = arith.constant 0 : index
      %81 = vector.load %arg3[%c1_27, %c0_28, %c0_29] : memref<2x8x128xi32, #tpu.memory_space<vmem>>, vector<1x8x128xi32>
      %82 = vector.shape_cast %81 : vector<1x8x128xi32> to vector<8x128xi32>
      %c17_i32 = arith.constant 17 : i32
      %83 = tpu.dynamic_rotate %23 by %c17_i32 dim 1 : vector<8x128xf32>, i32 -> vector<8x128xf32>
      %c17_i32_30 = arith.constant 17 : i32
      %84 = tpu.dynamic_rotate %24 by %c17_i32_30 dim 1 : vector<8x128xf32>, i32 -> vector<8x128xf32>
      %c1_i32_31 = arith.constant 1 : i32
      %85 = vector.broadcast %c1_i32_31 : i32 to vector<8x128xi32>
      %86 = arith.cmpi sge, %80, %85 : vector<8x128xi32>
      %c1_i32_32 = arith.constant 1 : i32
      %87 = vector.broadcast %c1_i32_32 : i32 to vector<8x128xi32>
      %88 = arith.cmpi sge, %82, %87 : vector<8x128xi32>
      %89 = arith.andi %86, %88 : vector<8x128xi1>
      %cst = arith.constant 0.000000e+00 : f32
      %90 = vector.broadcast %cst : f32 to vector<8x128xf32>
      %91 = arith.select %89, %83, %90 : vector<8x128xi1>, vector<8x128xf32>
      %cst_33 = arith.constant 0.000000e+00 : f32
      %92 = vector.broadcast %cst_33 : f32 to vector<8x128xf32>
      %93 = arith.select %89, %84, %92 : vector<8x128xi1>, vector<8x128xf32>
      %94 = vector.broadcast %25 : f32 to vector<8x128xf32>
      %95 = arith.mulf %94, %91 : vector<8x128xf32>
      %96 = vector.broadcast %52 : f32 to vector<8x128xf32>
      %97 = arith.mulf %96, %93 : vector<8x128xf32>
      %98 = arith.addf %95, %97 : vector<8x128xf32>
      %99 = vector.broadcast %34 : f32 to vector<8x128xf32>
      %100 = arith.mulf %99, %91 : vector<8x128xf32>
      %101 = vector.broadcast %61 : f32 to vector<8x128xf32>
      %102 = arith.mulf %101, %93 : vector<8x128xf32>
      %103 = arith.addf %100, %102 : vector<8x128xf32>
      %104 = vector.broadcast %43 : f32 to vector<8x128xf32>
      %105 = arith.mulf %104, %91 : vector<8x128xf32>
      %106 = vector.broadcast %70 : f32 to vector<8x128xf32>
      %107 = arith.mulf %106, %93 : vector<8x128xf32>
      %108 = arith.addf %105, %107 : vector<8x128xf32>
      %c16_i32 = arith.constant 16 : i32
      %109 = tpu.dynamic_rotate %23 by %c16_i32 dim 1 : vector<8x128xf32>, i32 -> vector<8x128xf32>
      %c16_i32_34 = arith.constant 16 : i32
      %110 = tpu.dynamic_rotate %24 by %c16_i32_34 dim 1 : vector<8x128xf32>, i32 -> vector<8x128xf32>
      %c1_i32_35 = arith.constant 1 : i32
      %111 = vector.broadcast %c1_i32_35 : i32 to vector<8x128xi32>
      %112 = arith.cmpi sge, %80, %111 : vector<8x128xi32>
      %cst_36 = arith.constant 0.000000e+00 : f32
      %113 = vector.broadcast %cst_36 : f32 to vector<8x128xf32>
      %114 = arith.select %112, %109, %113 : vector<8x128xi1>, vector<8x128xf32>
      %cst_37 = arith.constant 0.000000e+00 : f32
      %115 = vector.broadcast %cst_37 : f32 to vector<8x128xf32>
      %116 = arith.select %112, %110, %115 : vector<8x128xi1>, vector<8x128xf32>
      %117 = vector.broadcast %26 : f32 to vector<8x128xf32>
      %118 = arith.mulf %117, %114 : vector<8x128xf32>
      %119 = vector.broadcast %53 : f32 to vector<8x128xf32>
      %120 = arith.mulf %119, %116 : vector<8x128xf32>
      %121 = arith.addf %118, %120 : vector<8x128xf32>
      %122 = arith.addf %98, %121 : vector<8x128xf32>
      %123 = vector.broadcast %35 : f32 to vector<8x128xf32>
      %124 = arith.mulf %123, %114 : vector<8x128xf32>
      %125 = vector.broadcast %62 : f32 to vector<8x128xf32>
      %126 = arith.mulf %125, %116 : vector<8x128xf32>
      %127 = arith.addf %124, %126 : vector<8x128xf32>
      %128 = arith.addf %103, %127 : vector<8x128xf32>
      %129 = vector.broadcast %44 : f32 to vector<8x128xf32>
      %130 = arith.mulf %129, %114 : vector<8x128xf32>
      %131 = vector.broadcast %71 : f32 to vector<8x128xf32>
      %132 = arith.mulf %131, %116 : vector<8x128xf32>
      %133 = arith.addf %130, %132 : vector<8x128xf32>
      %134 = arith.addf %108, %133 : vector<8x128xf32>
      %c15_i32 = arith.constant 15 : i32
      %135 = tpu.dynamic_rotate %23 by %c15_i32 dim 1 : vector<8x128xf32>, i32 -> vector<8x128xf32>
      %c15_i32_38 = arith.constant 15 : i32
      %136 = tpu.dynamic_rotate %24 by %c15_i32_38 dim 1 : vector<8x128xf32>, i32 -> vector<8x128xf32>
      %c1_i32_39 = arith.constant 1 : i32
      %137 = vector.broadcast %c1_i32_39 : i32 to vector<8x128xi32>
      %138 = arith.cmpi sge, %80, %137 : vector<8x128xi32>
      %c14_i32 = arith.constant 14 : i32
      %139 = vector.broadcast %c14_i32 : i32 to vector<8x128xi32>
      %140 = arith.cmpi sle, %82, %139 : vector<8x128xi32>
      %141 = arith.andi %138, %140 : vector<8x128xi1>
      %cst_40 = arith.constant 0.000000e+00 : f32
      %142 = vector.broadcast %cst_40 : f32 to vector<8x128xf32>
      %143 = arith.select %141, %135, %142 : vector<8x128xi1>, vector<8x128xf32>
      %cst_41 = arith.constant 0.000000e+00 : f32
      %144 = vector.broadcast %cst_41 : f32 to vector<8x128xf32>
      %145 = arith.select %141, %136, %144 : vector<8x128xi1>, vector<8x128xf32>
      %146 = vector.broadcast %27 : f32 to vector<8x128xf32>
      %147 = arith.mulf %146, %143 : vector<8x128xf32>
      %148 = vector.broadcast %54 : f32 to vector<8x128xf32>
      %149 = arith.mulf %148, %145 : vector<8x128xf32>
      %150 = arith.addf %147, %149 : vector<8x128xf32>
      %151 = arith.addf %122, %150 : vector<8x128xf32>
      %152 = vector.broadcast %36 : f32 to vector<8x128xf32>
      %153 = arith.mulf %152, %143 : vector<8x128xf32>
      %154 = vector.broadcast %63 : f32 to vector<8x128xf32>
      %155 = arith.mulf %154, %145 : vector<8x128xf32>
      %156 = arith.addf %153, %155 : vector<8x128xf32>
      %157 = arith.addf %128, %156 : vector<8x128xf32>
      %158 = vector.broadcast %45 : f32 to vector<8x128xf32>
      %159 = arith.mulf %158, %143 : vector<8x128xf32>
      %160 = vector.broadcast %72 : f32 to vector<8x128xf32>
      %161 = arith.mulf %160, %145 : vector<8x128xf32>
      %162 = arith.addf %159, %161 : vector<8x128xf32>
      %163 = arith.addf %134, %162 : vector<8x128xf32>
      %c1_i32_42 = arith.constant 1 : i32
      %164 = tpu.dynamic_rotate %23 by %c1_i32_42 dim 1 : vector<8x128xf32>, i32 -> vector<8x128xf32>
      %c1_i32_43 = arith.constant 1 : i32
      %165 = tpu.dynamic_rotate %24 by %c1_i32_43 dim 1 : vector<8x128xf32>, i32 -> vector<8x128xf32>
      %c1_i32_44 = arith.constant 1 : i32
      %166 = vector.broadcast %c1_i32_44 : i32 to vector<8x128xi32>
      %167 = arith.cmpi sge, %82, %166 : vector<8x128xi32>
      %cst_45 = arith.constant 0.000000e+00 : f32
      %168 = vector.broadcast %cst_45 : f32 to vector<8x128xf32>
      %169 = arith.select %167, %164, %168 : vector<8x128xi1>, vector<8x128xf32>
      %cst_46 = arith.constant 0.000000e+00 : f32
      %170 = vector.broadcast %cst_46 : f32 to vector<8x128xf32>
      %171 = arith.select %167, %165, %170 : vector<8x128xi1>, vector<8x128xf32>
      %172 = vector.broadcast %28 : f32 to vector<8x128xf32>
      %173 = arith.mulf %172, %169 : vector<8x128xf32>
      %174 = vector.broadcast %55 : f32 to vector<8x128xf32>
      %175 = arith.mulf %174, %171 : vector<8x128xf32>
      %176 = arith.addf %173, %175 : vector<8x128xf32>
      %177 = arith.addf %151, %176 : vector<8x128xf32>
      %178 = vector.broadcast %37 : f32 to vector<8x128xf32>
      %179 = arith.mulf %178, %169 : vector<8x128xf32>
      %180 = vector.broadcast %64 : f32 to vector<8x128xf32>
      %181 = arith.mulf %180, %171 : vector<8x128xf32>
      %182 = arith.addf %179, %181 : vector<8x128xf32>
      %183 = arith.addf %157, %182 : vector<8x128xf32>
      %184 = vector.broadcast %46 : f32 to vector<8x128xf32>
      %185 = arith.mulf %184, %169 : vector<8x128xf32>
      %186 = vector.broadcast %73 : f32 to vector<8x128xf32>
      %187 = arith.mulf %186, %171 : vector<8x128xf32>
      %188 = arith.addf %185, %187 : vector<8x128xf32>
      %189 = arith.addf %163, %188 : vector<8x128xf32>
      %190 = vector.broadcast %29 : f32 to vector<8x128xf32>
      %191 = arith.mulf %190, %23 : vector<8x128xf32>
      %192 = vector.broadcast %56 : f32 to vector<8x128xf32>
      %193 = arith.mulf %192, %24 : vector<8x128xf32>
      %194 = arith.addf %191, %193 : vector<8x128xf32>
      %195 = arith.addf %177, %194 : vector<8x128xf32>
      %196 = vector.broadcast %38 : f32 to vector<8x128xf32>
      %197 = arith.mulf %196, %23 : vector<8x128xf32>
      %198 = vector.broadcast %65 : f32 to vector<8x128xf32>
      %199 = arith.mulf %198, %24 : vector<8x128xf32>
      %200 = arith.addf %197, %199 : vector<8x128xf32>
      %201 = arith.addf %183, %200 : vector<8x128xf32>
      %202 = vector.broadcast %47 : f32 to vector<8x128xf32>
      %203 = arith.mulf %202, %23 : vector<8x128xf32>
      %204 = vector.broadcast %74 : f32 to vector<8x128xf32>
      %205 = arith.mulf %204, %24 : vector<8x128xf32>
      %206 = arith.addf %203, %205 : vector<8x128xf32>
      %207 = arith.addf %189, %206 : vector<8x128xf32>
      %c127_i32 = arith.constant 127 : i32
      %208 = tpu.dynamic_rotate %23 by %c127_i32 dim 1 : vector<8x128xf32>, i32 -> vector<8x128xf32>
      %c127_i32_47 = arith.constant 127 : i32
      %209 = tpu.dynamic_rotate %24 by %c127_i32_47 dim 1 : vector<8x128xf32>, i32 -> vector<8x128xf32>
      %c14_i32_48 = arith.constant 14 : i32
      %210 = vector.broadcast %c14_i32_48 : i32 to vector<8x128xi32>
      %211 = arith.cmpi sle, %82, %210 : vector<8x128xi32>
      %cst_49 = arith.constant 0.000000e+00 : f32
      %212 = vector.broadcast %cst_49 : f32 to vector<8x128xf32>
      %213 = arith.select %211, %208, %212 : vector<8x128xi1>, vector<8x128xf32>
      %cst_50 = arith.constant 0.000000e+00 : f32
      %214 = vector.broadcast %cst_50 : f32 to vector<8x128xf32>
      %215 = arith.select %211, %209, %214 : vector<8x128xi1>, vector<8x128xf32>
      %216 = vector.broadcast %30 : f32 to vector<8x128xf32>
      %217 = arith.mulf %216, %213 : vector<8x128xf32>
      %218 = vector.broadcast %57 : f32 to vector<8x128xf32>
      %219 = arith.mulf %218, %215 : vector<8x128xf32>
      %220 = arith.addf %217, %219 : vector<8x128xf32>
      %221 = arith.addf %195, %220 : vector<8x128xf32>
      %222 = vector.broadcast %39 : f32 to vector<8x128xf32>
      %223 = arith.mulf %222, %213 : vector<8x128xf32>
      %224 = vector.broadcast %66 : f32 to vector<8x128xf32>
      %225 = arith.mulf %224, %215 : vector<8x128xf32>
      %226 = arith.addf %223, %225 : vector<8x128xf32>
      %227 = arith.addf %201, %226 : vector<8x128xf32>
      %228 = vector.broadcast %48 : f32 to vector<8x128xf32>
      %229 = arith.mulf %228, %213 : vector<8x128xf32>
      %230 = vector.broadcast %75 : f32 to vector<8x128xf32>
      %231 = arith.mulf %230, %215 : vector<8x128xf32>
      %232 = arith.addf %229, %231 : vector<8x128xf32>
      %233 = arith.addf %207, %232 : vector<8x128xf32>
      %c113_i32 = arith.constant 113 : i32
      %234 = tpu.dynamic_rotate %23 by %c113_i32 dim 1 : vector<8x128xf32>, i32 -> vector<8x128xf32>
      %c113_i32_51 = arith.constant 113 : i32
      %235 = tpu.dynamic_rotate %24 by %c113_i32_51 dim 1 : vector<8x128xf32>, i32 -> vector<8x128xf32>
      %c6_i32 = arith.constant 6 : i32
      %236 = vector.broadcast %c6_i32 : i32 to vector<8x128xi32>
      %237 = arith.cmpi sle, %80, %236 : vector<8x128xi32>
      %c1_i32_52 = arith.constant 1 : i32
      %238 = vector.broadcast %c1_i32_52 : i32 to vector<8x128xi32>
      %239 = arith.cmpi sge, %82, %238 : vector<8x128xi32>
      %240 = arith.andi %237, %239 : vector<8x128xi1>
      %cst_53 = arith.constant 0.000000e+00 : f32
      %241 = vector.broadcast %cst_53 : f32 to vector<8x128xf32>
      %242 = arith.select %240, %234, %241 : vector<8x128xi1>, vector<8x128xf32>
      %cst_54 = arith.constant 0.000000e+00 : f32
      %243 = vector.broadcast %cst_54 : f32 to vector<8x128xf32>
      %244 = arith.select %240, %235, %243 : vector<8x128xi1>, vector<8x128xf32>
      %245 = vector.broadcast %31 : f32 to vector<8x128xf32>
      %246 = arith.mulf %245, %242 : vector<8x128xf32>
      %247 = vector.broadcast %58 : f32 to vector<8x128xf32>
      %248 = arith.mulf %247, %244 : vector<8x128xf32>
      %249 = arith.addf %246, %248 : vector<8x128xf32>
      %250 = arith.addf %221, %249 : vector<8x128xf32>
      %251 = vector.broadcast %40 : f32 to vector<8x128xf32>
      %252 = arith.mulf %251, %242 : vector<8x128xf32>
      %253 = vector.broadcast %67 : f32 to vector<8x128xf32>
      %254 = arith.mulf %253, %244 : vector<8x128xf32>
      %255 = arith.addf %252, %254 : vector<8x128xf32>
      %256 = arith.addf %227, %255 : vector<8x128xf32>
      %257 = vector.broadcast %49 : f32 to vector<8x128xf32>
      %258 = arith.mulf %257, %242 : vector<8x128xf32>
      %259 = vector.broadcast %76 : f32 to vector<8x128xf32>
      %260 = arith.mulf %259, %244 : vector<8x128xf32>
      %261 = arith.addf %258, %260 : vector<8x128xf32>
      %262 = arith.addf %233, %261 : vector<8x128xf32>
      %c112_i32 = arith.constant 112 : i32
      %263 = tpu.dynamic_rotate %23 by %c112_i32 dim 1 : vector<8x128xf32>, i32 -> vector<8x128xf32>
      %c112_i32_55 = arith.constant 112 : i32
      %264 = tpu.dynamic_rotate %24 by %c112_i32_55 dim 1 : vector<8x128xf32>, i32 -> vector<8x128xf32>
      %c6_i32_56 = arith.constant 6 : i32
      %265 = vector.broadcast %c6_i32_56 : i32 to vector<8x128xi32>
      %266 = arith.cmpi sle, %80, %265 : vector<8x128xi32>
      %cst_57 = arith.constant 0.000000e+00 : f32
      %267 = vector.broadcast %cst_57 : f32 to vector<8x128xf32>
      %268 = arith.select %266, %263, %267 : vector<8x128xi1>, vector<8x128xf32>
      %cst_58 = arith.constant 0.000000e+00 : f32
      %269 = vector.broadcast %cst_58 : f32 to vector<8x128xf32>
      %270 = arith.select %266, %264, %269 : vector<8x128xi1>, vector<8x128xf32>
      %271 = vector.broadcast %32 : f32 to vector<8x128xf32>
      %272 = arith.mulf %271, %268 : vector<8x128xf32>
      %273 = vector.broadcast %59 : f32 to vector<8x128xf32>
      %274 = arith.mulf %273, %270 : vector<8x128xf32>
      %275 = arith.addf %272, %274 : vector<8x128xf32>
      %276 = arith.addf %250, %275 : vector<8x128xf32>
      %277 = vector.broadcast %41 : f32 to vector<8x128xf32>
      %278 = arith.mulf %277, %268 : vector<8x128xf32>
      %279 = vector.broadcast %68 : f32 to vector<8x128xf32>
      %280 = arith.mulf %279, %270 : vector<8x128xf32>
      %281 = arith.addf %278, %280 : vector<8x128xf32>
      %282 = arith.addf %256, %281 : vector<8x128xf32>
      %283 = vector.broadcast %50 : f32 to vector<8x128xf32>
      %284 = arith.mulf %283, %268 : vector<8x128xf32>
      %285 = vector.broadcast %77 : f32 to vector<8x128xf32>
      %286 = arith.mulf %285, %270 : vector<8x128xf32>
      %287 = arith.addf %284, %286 : vector<8x128xf32>
      %288 = arith.addf %262, %287 : vector<8x128xf32>
      %c111_i32 = arith.constant 111 : i32
      %289 = tpu.dynamic_rotate %23 by %c111_i32 dim 1 : vector<8x128xf32>, i32 -> vector<8x128xf32>
      %c111_i32_59 = arith.constant 111 : i32
      %290 = tpu.dynamic_rotate %24 by %c111_i32_59 dim 1 : vector<8x128xf32>, i32 -> vector<8x128xf32>
      %c6_i32_60 = arith.constant 6 : i32
      %291 = vector.broadcast %c6_i32_60 : i32 to vector<8x128xi32>
      %292 = arith.cmpi sle, %80, %291 : vector<8x128xi32>
      %c14_i32_61 = arith.constant 14 : i32
      %293 = vector.broadcast %c14_i32_61 : i32 to vector<8x128xi32>
      %294 = arith.cmpi sle, %82, %293 : vector<8x128xi32>
      %295 = arith.andi %292, %294 : vector<8x128xi1>
      %cst_62 = arith.constant 0.000000e+00 : f32
      %296 = vector.broadcast %cst_62 : f32 to vector<8x128xf32>
      %297 = arith.select %295, %289, %296 : vector<8x128xi1>, vector<8x128xf32>
      %cst_63 = arith.constant 0.000000e+00 : f32
      %298 = vector.broadcast %cst_63 : f32 to vector<8x128xf32>
      %299 = arith.select %295, %290, %298 : vector<8x128xi1>, vector<8x128xf32>
      %300 = vector.broadcast %33 : f32 to vector<8x128xf32>
      %301 = arith.mulf %300, %297 : vector<8x128xf32>
      %302 = vector.broadcast %60 : f32 to vector<8x128xf32>
      %303 = arith.mulf %302, %299 : vector<8x128xf32>
      %304 = arith.addf %301, %303 : vector<8x128xf32>
      %305 = arith.addf %276, %304 : vector<8x128xf32>
      %306 = vector.broadcast %42 : f32 to vector<8x128xf32>
      %307 = arith.mulf %306, %297 : vector<8x128xf32>
      %308 = vector.broadcast %69 : f32 to vector<8x128xf32>
      %309 = arith.mulf %308, %299 : vector<8x128xf32>
      %310 = arith.addf %307, %309 : vector<8x128xf32>
      %311 = arith.addf %282, %310 : vector<8x128xf32>
      %312 = vector.broadcast %51 : f32 to vector<8x128xf32>
      %313 = arith.mulf %312, %297 : vector<8x128xf32>
      %314 = vector.broadcast %78 : f32 to vector<8x128xf32>
      %315 = arith.mulf %314, %299 : vector<8x128xf32>
      %316 = arith.addf %313, %315 : vector<8x128xf32>
      %317 = arith.addf %288, %316 : vector<8x128xf32>
      %318 = tpu.iota {dimensions = array<i32: 0>} : vector<8x128xi32>
      %c1_i32_64 = arith.constant 1 : i32
      %319 = tpu.dynamic_rotate %305 by %c1_i32_64 dim 0 : vector<8x128xf32>, i32 -> vector<8x128xf32>
      %c1_i32_65 = arith.constant 1 : i32
      %320 = vector.broadcast %c1_i32_65 : i32 to vector<8x128xi32>
      %321 = arith.cmpi sge, %318, %320 : vector<8x128xi32>
      %cst_66 = arith.constant 0.000000e+00 : f32
      %322 = vector.broadcast %cst_66 : f32 to vector<8x128xf32>
      %323 = arith.select %321, %319, %322 : vector<8x128xi1>, vector<8x128xf32>
      %324 = arith.addf %311, %323 : vector<8x128xf32>
      %c7_i32 = arith.constant 7 : i32
      %325 = tpu.dynamic_rotate %317 by %c7_i32 dim 0 : vector<8x128xf32>, i32 -> vector<8x128xf32>
      %c6_i32_67 = arith.constant 6 : i32
      %326 = vector.broadcast %c6_i32_67 : i32 to vector<8x128xi32>
      %327 = arith.cmpi sle, %318, %326 : vector<8x128xi32>
      %cst_68 = arith.constant 0.000000e+00 : f32
      %328 = vector.broadcast %cst_68 : f32 to vector<8x128xf32>
      %329 = arith.select %327, %325, %328 : vector<8x128xi1>, vector<8x128xf32>
      %330 = arith.addf %324, %329 : vector<8x128xf32>
      %331 = arith.negf %330 : vector<8x128xf32>
      %332 = math.exp %331 : vector<8x128xf32>
      %cst_69 = arith.constant 1.000000e+00 : f32
      %333 = vector.broadcast %cst_69 : f32 to vector<8x128xf32>
      %334 = arith.addf %333, %332 : vector<8x128xf32>
      %335 = arith.divf %333, %334 : vector<8x128xf32>
      %c0_70 = arith.constant 0 : index
      %c0_71 = arith.constant 0 : index
      %c0_72 = arith.constant 0 : index
      %336 = vector.load %arg5[%c0_70, %c0_71, %c0_72] : memref<1x8x128xf32, #tpu.memory_space<vmem>>, vector<1x8x128xf32>
      %337 = vector.shape_cast %336 : vector<1x8x128xf32> to vector<8x128xf32>
      %338 = vector.shape_cast %335 : vector<8x128xf32> to vector<1x8x128xf32>
      tpu.vector_store %arg5[%c0_70, %c0_71, %c0_72], %338 {strides = array<i32>} : memref<1x8x128xf32, #tpu.memory_space<vmem>>, vector<1x8x128xf32>,
    } else {
    }
    return
  }
  func.func @transform_0(%arg0: i32, %arg1: i32) -> i32 {
    %c0_i32 = arith.constant 0 : i32
    %c0_i32_0 = arith.constant 0 : i32
    return %c0_i32 : i32
  }
  func.func @transform_1(%arg0: i32, %arg1: i32) -> (i32, i32, i32) {
    %c0_i32 = arith.constant 0 : i32
    %c0_i32_0 = arith.constant 0 : i32
    %c0_i32_1 = arith.constant 0 : i32
    %c0_i32_2 = arith.constant 0 : i32
    return %c0_i32, %c0_i32_0, %c0_i32_1 : i32, i32, i32
  }
  func.func @transform_2(%arg0: i32, %arg1: i32) -> (i32, i32, i32, i32) {
    %c0_i32 = arith.constant 0 : i32
    %c0_i32_0 = arith.constant 0 : i32
    %c0_i32_1 = arith.constant 0 : i32
    return %arg0, %arg1, %c0_i32, %c0_i32_0 : i32, i32, i32, i32
  }
  func.func @transform_3(%arg0: i32, %arg1: i32) -> (i32, i32, i32) {
    %c0_i32 = arith.constant 0 : i32
    %c0_i32_0 = arith.constant 0 : i32
    %c0_i32_1 = arith.constant 0 : i32
    return %arg0, %c0_i32, %c0_i32_0 : i32, i32, i32
  }
}

</mosaic_0001>

<llo_original>
// kernel: tpu_custom_call.1
$region0: #{tpu_custom_call.1}
  #allocation0 [shape = 'u32[]', space=smem, size = 0x4, offset = 0x4, fixed_abs, tag = 'smem constant byte address 0x4 - core index']
  #allocation1 [shape = 'u32[144,128]{1,0:T(1,128)}', space=vmem, size = 0x12000, scoped, tag = 'internal scratch']
  #allocation2 [shape = 'f32[8,128]{1,0:T(8,128)}', space=vmem, size = 0x1000, scoped, tag = 'scratch operand']
  #allocation3 [shape = 'f32[8,128]{1,0:T(8,128)}', space=vmem, size = 0x1000, scoped, tag = 'scratch operand']
  %s0 = inlined_call_operand.hbm [shape: f32[54], index: 0, kind: input, shape index: {}]
  %s1 = inlined_call_operand.hbm [shape: s32[2,8,128], index: 1, kind: input, shape index: {}]
  %s2 = inlined_call_operand.hbm [shape: f32[2,8,8,128], index: 2, kind: input, shape index: {}]
  %s3 = inlined_call_operand.hbm [shape: f32[2,8,128], index: 3, kind: output, shape index: {}]
  %s4 = sld [smem:[#allocation0]]
  $region69: #{tpu_custom_call.1} parent=0
    _
  %s6 = ssub.s32 1, %s4
  %s7 = scalar_select 0, %s6, %s4
  $region1: #{tpu_custom_call.1} parent=0
    #allocation4 [shape = 'u8[512]{0}', space=smem, size = 0x200, scoped, tag = 'input window, operand 0, single buffered']
    #allocation5 [shape = 's32[2]{0}', space=sflag, size = 0x8, scoped, tag = 'scoped memory for tpu_custom_call.1']
    #allocation6 [shape = 's32[2]{0}', space=sflag, size = 0x8, scoped, tag = 'scoped memory for tpu_custom_call.1']
    #allocation7 [shape = 's32[2]{0}', space=sflag, size = 0x8, scoped, tag = 'scoped memory for tpu_custom_call.1']
    #allocation8 [shape = 'u8[8192]{0}', space=vmem, size = 0x2000, scoped, tag = 'input window, operand 1, single buffered']
    #allocation9 [shape = 'u8[32768]{0}', space=vmem, size = 0x8000, scoped, tag = 'input window, operand 2']
    #allocation10 [shape = 's32[2]{0}', space=sflag, size = 0x8, scoped, tag = 'scoped memory for tpu_custom_call.1']
    #allocation11 [shape = 'u8[8192]{0}', space=vmem, size = 0x2000, scoped, tag = 'output window, operand 0']
    %8 = vsyncpa [#allocation7], 0
    %9 = vsyncpa [#allocation5], 0
    %10 = vsyncpa [#allocation10], 0
    %s11 = scalar_lea.sflag [#allocation10], 1
    %12 = vsyncpa %s11, 0
    %13 = vsyncpa [#allocation6], 0
    %s14 = scalar_lea.sflag [#allocation6], 1
    %15 = vsyncpa %s14, 0
    loop: start=0, step=1, limit=6
    $region2: #{tpu_custom_call.1} parent=1 // loop_pre_header
      _
    $region3: #{tpu_custom_call.1} parent=1 // loop_header
      %s17 = sphi 0, %s21
      %p18 = scmp.ge.s32.totalorder %s17, 6
      %s24 = sphi 0, %s36
      %s25 = sphi 0, %s32
      %s26 = sphi 0, %s24
      %s27 = sphi 0, %s25
      %s28 = sphi 0, %s26
      %s29 = sphi 0, %s27
      %s37 = sphi 0, %s37
      %s39 = sphi 0, %s37
      %s40 = sphi 0, %s39
      %s54 = sphi 0, %s40
      %s58 = sphi 0, %s58
      %s60 = sphi 0, %s58
      %s61 = sphi 0, %s60
      %s75 = sphi 0, %s61
      %s83 = sphi 0, %s85
      %s86 = sphi 0, %s83
      %s87 = sphi 0, %s86
      %s103 = sphi 0, %s87
      %s109 = sphi 0, %s111
      %s112 = sphi 0, %s109
      %s113 = sphi 0, %s112
      %s129 = sphi 0, %s113
    $region4: #{tpu_custom_call.1} parent=1 // loop_header_branch
      %20 = sbr.rel (%p18) target = $region8
    $region5: #{tpu_custom_call.1} parent=1 // loop_body
      %s22 = ssub.s32 %s17, 1
      %s23 = ssub.s32 %s17, 2
      %s30 = sadd.s32 1, %s25
      %p31 = scmp.ge.s32.totalorder %s30, 2
      %s32 = scalar_select %p31, 0, %s30
      %s33 = sadd.s32 1, %s24
      %s34 = scalar_select %p31, %s33, %s24
      %p35 = scmp.ge.s32.totalorder %s34, 2
      %s36 = scalar_select %p35, 0, %s34
      %s38 = sadd.s32 %s37, 1
      %p41 = scmp.eq.s32.totalorder %s17, 3
      %p42 = scmp.ne.s32.totalorder %s37, %s39
      %p43 = scmp.eq.s32.totalorder %s17, 0
      %p44 = por %p42, %p43
      %p45 = scmp.ne.s32.totalorder %s37, %s39
      %p46 = scmp.eq.s32.totalorder %s22, 3
      %p47 = por %p45, %p46
      %p48 = scmp.ne.s32.totalorder %s39, %s40
      %p49 = scmp.eq.s32.totalorder %s22, 0
      %p50 = por %p48, %p49
      %p51 = scmp.ne.s32.totalorder %s39, %s40
      %p52 = scmp.eq.s32.totalorder %s23, 3
      %p53 = por %p51, %p52
      %p55 = scmp.ne.s32.totalorder %s40, %s54
      %p56 = scmp.eq.s32.totalorder %s23, 0
      %p57 = por %p55, %p56
      %s59 = sadd.s32 %s58, 1
      %p62 = scmp.eq.s32.totalorder %s17, 3
      %p63 = scmp.ne.s32.totalorder %s58, %s60
      %p64 = scmp.eq.s32.totalorder %s17, 0
      %p65 = por %p63, %p64
      %p66 = scmp.ne.s32.totalorder %s58, %s60
      %p67 = scmp.eq.s32.totalorder %s22, 3
      %p68 = por %p66, %p67
      %p69 = scmp.ne.s32.totalorder %s60, %s61
      %p70 = scmp.eq.s32.totalorder %s22, 0
      %p71 = por %p69, %p70
      %p72 = scmp.ne.s32.totalorder %s60, %s61
      %p73 = scmp.eq.s32.totalorder %s23, 3
      %p74 = por %p72, %p73
      %p76 = scmp.ne.s32.totalorder %s61, %s75
      %p77 = scmp.eq.s32.totalorder %s23, 0
      %p78 = por %p76, %p77
      %s79 = ssub.s32 %s24, %s36
      %s80 = ssub.s32 %s25, %s32
      %s81 = sor.u32 %s79, %s80
      %p82 = scmp.eq.s32.totalorder %s81, 0
      %s84 = sadd.s32 %s83, 1
      %s85 = scalar_select %p82, %s83, %s84
      %p88 = pneg %p82
      %p89 = scmp.eq.s32.totalorder %s17, 3
      %p90 = por %p88, %p89
      %p91 = scmp.ne.s32.totalorder %s83, %s86
      %p92 = scmp.eq.s32.totalorder %s17, 0
      %p93 = por %p91, %p92
      %p94 = scmp.ne.s32.totalorder %s83, %s86
      %p95 = scmp.eq.s32.totalorder %s22, 3
      %p96 = por %p94, %p95
      %p97 = scmp.ne.s32.totalorder %s86, %s87
      %p98 = scmp.eq.s32.totalorder %s22, 0
      %p99 = por %p97, %p98
      %p100 = scmp.ne.s32.totalorder %s86, %s87
      %p101 = scmp.eq.s32.totalorder %s23, 3
      %p102 = por %p100, %p101
      %p104 = scmp.ne.s32.totalorder %s87, %s103
      %p105 = scmp.eq.s32.totalorder %s23, 0
      %p106 = por %p104, %p105
      %s107 = ssub.s32 %s24, %s36
      %p108 = scmp.eq.s32.totalorder %s107, 0
      %s110 = sadd.s32 %s109, 1
      %s111 = scalar_select %p108, %s109, %s110
      %p114 = pneg %p108
      %p115 = scmp.eq.s32.totalorder %s17, 3
      %p116 = por %p114, %p115
      %p117 = scmp.ne.s32.totalorder %s109, %s112
      %p118 = scmp.eq.s32.totalorder %s17, 0
      %p119 = por %p117, %p118
      %p120 = scmp.ne.s32.totalorder %s109, %s112
      %p121 = scmp.eq.s32.totalorder %s22, 3
      %p122 = por %p120, %p121
      %p123 = scmp.ne.s32.totalorder %s112, %s113
      %p124 = scmp.eq.s32.totalorder %s22, 0
      %p125 = por %p123, %p124
      %p126 = scmp.ne.s32.totalorder %s112, %s113
      %p127 = scmp.eq.s32.totalorder %s23, 3
      %p128 = por %p126, %p127
      %p130 = scmp.ne.s32.totalorder %s113, %s129
      %p131 = scmp.eq.s32.totalorder %s23, 0
      %p132 = por %p130, %p131
      %p133 = scmp.le.s32.totalorder 1, %s17
      %p134 = scmp.lt.s32.totalorder %s17, 5
      %p135 = pnand %p133, %p134
      %p136 = pneg %p135
      // Predicated region
      $region9: #{tpu_custom_call.1} parent=5 // pred_check
        _
      $region10: #{tpu_custom_call.1} parent=5 // pred_check_branch
        %138 = sbr.rel (%p135) target = $region12
      $region11: #{tpu_custom_call.1} parent=5 // pred_region
        %s139 = ssub.s32 %s17, 1
        // Predicated region
        $region13: #{tpu_custom_call.1} parent=11 // pred_check
          %p140 = pneg %p50
        $region14: #{tpu_custom_call.1} parent=11 // pred_check_branch
          %142 = sbr.rel (%p140) target = $region16
        $region15: #{tpu_custom_call.1} parent=11 // pred_region
          %s144 = ssub.s32 16, 16
          %145 = vsyncadd [#allocation7], %s144
          %148 = dma.hbm_to_smem %s0, 16, [#allocation4], [#allocation7]
        $region16: #{tpu_custom_call.1} parent=11 // pred_fallthru
          _
        // Predicated region
        $region17: #{tpu_custom_call.1} parent=11 // pred_check
          %p149 = pneg %p71
        $region18: #{tpu_custom_call.1} parent=11 // pred_check_branch
          %151 = sbr.rel (%p149) target = $region20
        $region19: #{tpu_custom_call.1} parent=11 // pred_region
          %s153 = ssub.s32 256, 256
          %154 = vsyncadd [#allocation5], %s153
          %s155 = sshll.u32 [#allocation8], 4
          %s156 = int_to_ptr.vmem [resolvable:$true] %s155
          %161 = dma.hbm_to_vmem [thread:$0]  %s1, 256, %s156, [#allocation5], 128, 128, 8
        $region20: #{tpu_custom_call.1} parent=11 // pred_fallthru
          _
      $region12: #{tpu_custom_call.1} parent=5 // pred_fallthru
        _
      %p162 = scmp.lt.s32.totalorder %s17, 4
      // Predicated region
      $region21: #{tpu_custom_call.1} parent=5 // pred_check
        %p163 = pneg %p162
      $region22: #{tpu_custom_call.1} parent=5 // pred_check_branch
        %165 = sbr.rel (%p163) target = $region24
      $region23: #{tpu_custom_call.1} parent=5 // pred_region
        // Predicated region
        $region25: #{tpu_custom_call.1} parent=23 // pred_check
          %p166 = pneg %p93
        $region26: #{tpu_custom_call.1} parent=23 // pred_check_branch
          %168 = sbr.rel (%p166) target = $region28
        $region27: #{tpu_custom_call.1} parent=23 // pred_region
          %s169 = sand.u32 %s83, 1
          %s170 = scalar_lea.sflag [#allocation10], %s169
          %s171 = sand.u32 %s83, 1
          %s172 = smul.addr %s171, 32
          %s173 = scalar_lea.vmem [#allocation9], %s172
          %s174 = smul.u32 4, %s25
          %s176 = ssub.s32 512, 512
          %177 = vsyncadd %s170, %s176
          %s178 = smul.addr %s24, 8
          %s179 = sadd.s32 %s174, %s178
          %s180 = smul.addr %s179, 128
          %s181 = scalar_lea.hbm %s2, %s180
          %s182 = sshll.u32 %s173, 4
          %s183 = int_to_ptr.vmem [resolvable:$true] %s182
          %188 = dma.hbm_to_vmem [thread:$0]  %s181, 512, %s183, %s170, 128, 128, 8
        $region28: #{tpu_custom_call.1} parent=23 // pred_fallthru
          _
      $region24: #{tpu_custom_call.1} parent=5 // pred_fallthru
        _
      %p189 = scmp.le.s32.totalorder 1, %s17
      %p190 = scmp.lt.s32.totalorder %s17, 5
      %p191 = pnand %p189, %p190
      %p192 = pneg %p191
      // Predicated region
      $region29: #{tpu_custom_call.1} parent=5 // pred_check
        _
      $region30: #{tpu_custom_call.1} parent=5 // pred_check_branch
        %194 = sbr.rel (%p191) target = $region32
      $region31: #{tpu_custom_call.1} parent=5 // pred_region
        %s195 = ssub.s32 %s17, 1
        // Predicated region
        $region33: #{tpu_custom_call.1} parent=31 // pred_check
          %p196 = pneg %p50
        $region34: #{tpu_custom_call.1} parent=31 // pred_check_branch
          %198 = sbr.rel (%p196) target = $region36
        $region35: #{tpu_custom_call.1} parent=31 // pred_region
          %199 = dma.done [#allocation7], 16
        $region36: #{tpu_custom_call.1} parent=31 // pred_fallthru
          _
        // Predicated region
        $region37: #{tpu_custom_call.1} parent=31 // pred_check
          %p200 = pneg %p71
        $region38: #{tpu_custom_call.1} parent=31 // pred_check_branch
          %202 = sbr.rel (%p200) target = $region40
        $region39: #{tpu_custom_call.1} parent=31 // pred_region
          %203 = dma.done [#allocation5], 256
        $region40: #{tpu_custom_call.1} parent=31 // pred_fallthru
          _
        %s204 = sand.u32 %s86, 1
        %s205 = scalar_lea.sflag [#allocation10], %s204
        %s206 = sand.u32 %s86, 1
        %s207 = smul.addr %s206, 32
        %s208 = scalar_lea.vmem [#allocation9], %s207
        // Predicated region
        $region41: #{tpu_custom_call.1} parent=31 // pred_check
          %p209 = pneg %p99
        $region42: #{tpu_custom_call.1} parent=31 // pred_check_branch
          %211 = sbr.rel (%p209) target = $region44
        $region43: #{tpu_custom_call.1} parent=31 // pred_region
          %212 = dma.done %s205, 512
        $region44: #{tpu_custom_call.1} parent=31 // pred_fallthru
          _
        %213 = sfence
        %p214 = pneg %p50
        %p215 = pneg %p47
        %p216 = pneg %p71
        %p217 = pneg %p68
        %s218 = sand.u32 %s86, 1
        %s219 = scalar_lea.sflag [#allocation10], %s218
        %s220 = sand.u32 %s86, 1
        %s221 = smul.addr %s220, 32
        %s222 = scalar_lea.vmem [#allocation9], %s221
        %p223 = pneg %p99
        %p224 = pneg %p96
        %p225 = pneg %p125
        %p226 = pneg %p122
        %s227 = sand.u32 %s112, 1
        %s228 = scalar_lea.sflag [#allocation6], %s227
        %s229 = sand.u32 %s112, 1
        %s230 = smul.addr %s229, 8
        %s231 = scalar_lea.vmem [#allocation11], %s230
        %s232 = smul.u32 4, %s27
        %v233 = vld [vmem:[%s208] sm:$0xff]
        %s234 = scalar_lea.vmem %s208, 8 [#allocation9]
        %v235 = vld [vmem:[%s234] sm:$0xff]
        %v236 = vadd.f32 %v233, %v235
        %v237 = vmax.f32 %v233, %v235
        %s238 = scalar_lea.vmem %s208, 16 [#allocation9]
        %v239 = vld [vmem:[%s238] sm:$0xff]
        %v240 = vadd.f32 %v236, %v239
        %v241 = vmax.f32 %v237, %v239
        %s242 = scalar_lea.vmem %s208, 24 [#allocation9]
        %v243 = vld [vmem:[%s242] sm:$0xff]
        %v244 = vadd.f32 %v240, %v243
        %v245 = vmax.f32 %v241, %v243
        %p246 = scmp.eq.s32.totalorder %s27, 0
        // Predicated region
        $region45: #{tpu_custom_call.1} parent=31 // pred_check
          %p247 = pneg %p246
        $region46: #{tpu_custom_call.1} parent=31 // pred_check_branch
          %249 = sbr.rel (%p247) target = $region48
        $region47: #{tpu_custom_call.1} parent=31 // pred_region
          %250 = vst [vmem:[#allocation2] sm:$0xff] %v244
          %251 = vst [vmem:[#allocation3] sm:$0xff] %v245
        $region48: #{tpu_custom_call.1} parent=31 // pred_fallthru
          _
        %p252 = scmp.ne.s32.totalorder %s27, 0
        // Predicated region
        $region49: #{tpu_custom_call.1} parent=31 // pred_check
          %p253 = pneg %p252
        $region50: #{tpu_custom_call.1} parent=31 // pred_check_branch
          %255 = sbr.rel (%p253) target = $region52
        $region51: #{tpu_custom_call.1} parent=31 // pred_region
          %v256 = vld [vmem:[#allocation2] sm:$0xff]
          %v257 = vadd.f32 %v256, %v244
          %258 = vst [vmem:[#allocation2] sm:$0xff] %v257
          %v259 = vld [vmem:[#allocation3] sm:$0xff]
          %v260 = vmax.f32 %v259, %v245
          %261 = vst [vmem:[#allocation3] sm:$0xff] %v260
        $region52: #{tpu_custom_call.1} parent=31 // pred_fallthru
          _
        %p262 = scmp.eq.s32.totalorder %s27, 1
        // Predicated region
        $region53: #{tpu_custom_call.1} parent=31 // pred_check
          %p263 = pneg %p262
        $region54: #{tpu_custom_call.1} parent=31 // pred_check_branch
          %265 = sbr.rel (%p263) target = $region56
        $region55: #{tpu_custom_call.1} parent=31 // pred_region
          %v266 = vld [vmem:[#allocation2] sm:$0xff]
          %v267 = vld [vmem:[#allocation3] sm:$0xff]
          %s268 = sld [smem:[#allocation4]]
          %s269 = sld [smem:[#allocation4 + $0x1]]
          %s270 = sld [smem:[#allocation4 + $0x2]]
          %s271 = sld [smem:[#allocation4 + $0x3]]
          %s272 = sld [smem:[#allocation4 + $0x4]]
          %s273 = sld [smem:[#allocation4 + $0x5]]
          %s274 = sld [smem:[#allocation4 + $0x6]]
          %s275 = sld [smem:[#allocation4 + $0x7]]
          %s276 = sld [smem:[#allocation4 + $0x8]]
          %s277 = sld [smem:[#allocation4 + $0x9]]
          %s278 = sld [smem:[#allocation4 + $0xa]]
          %s279 = sld [smem:[#allocation4 + $0xb]]
          %s280 = sld [smem:[#allocation4 + $0xc]]
          %s281 = sld [smem:[#allocation4 + $0xd]]
          %s282 = sld [smem:[#allocation4 + $0xe]]
          %s283 = sld [smem:[#allocation4 + $0xf]]
          %s284 = sld [smem:[#allocation4 + $0x10]]
          %s285 = sld [smem:[#allocation4 + $0x11]]
          %s286 = sld [smem:[#allocation4 + $0x12]]
          %s287 = sld [smem:[#allocation4 + $0x13]]
          %s288 = sld [smem:[#allocation4 + $0x14]]
          %s289 = sld [smem:[#allocation4 + $0x15]]
          %s290 = sld [smem:[#allocation4 + $0x16]]
          %s291 = sld [smem:[#allocation4 + $0x17]]
          %s292 = sld [smem:[#allocation4 + $0x18]]
          %s293 = sld [smem:[#allocation4 + $0x19]]
          %s294 = sld [smem:[#allocation4 + $0x1a]]
          %s295 = sld [smem:[#allocation4 + $0x1b]]
          %s296 = sld [smem:[#allocation4 + $0x1c]]
          %s297 = sld [smem:[#allocation4 + $0x1d]]
          %s298 = sld [smem:[#allocation4 + $0x1e]]
          %s299 = sld [smem:[#allocation4 + $0x1f]]
          %s300 = sld [smem:[#allocation4 + $0x20]]
          %s301 = sld [smem:[#allocation4 + $0x21]]
          %s302 = sld [smem:[#allocation4 + $0x22]]
          %s303 = sld [smem:[#allocation4 + $0x23]]
          %s304 = sld [smem:[#allocation4 + $0x24]]
          %s305 = sld [smem:[#allocation4 + $0x25]]
          %s306 = sld [smem:[#allocation4 + $0x26]]
          %s307 = sld [smem:[#allocation4 + $0x27]]
          %s308 = sld [smem:[#allocation4 + $0x28]]
          %s309 = sld [smem:[#allocation4 + $0x29]]
          %s310 = sld [smem:[#allocation4 + $0x2a]]
          %s311 = sld [smem:[#allocation4 + $0x2b]]
          %s312 = sld [smem:[#allocation4 + $0x2c]]
          %s313 = sld [smem:[#allocation4 + $0x2d]]
          %s314 = sld [smem:[#allocation4 + $0x2e]]
          %s315 = sld [smem:[#allocation4 + $0x2f]]
          %s316 = sld [smem:[#allocation4 + $0x30]]
          %s317 = sld [smem:[#allocation4 + $0x31]]
          %s318 = sld [smem:[#allocation4 + $0x32]]
          %s319 = sld [smem:[#allocation4 + $0x33]]
          %s320 = sld [smem:[#allocation4 + $0x34]]
          %s321 = sld [smem:[#allocation4 + $0x35]]
          %v322 = vld [vmem:[#allocation8] sm:$0xff]
          %s323 = scalar_lea.vmem [#allocation8], 8
          %v324 = vld [vmem:[%s323] sm:$0xff]
          %325 = vrot.lane.b32.xlu0 %v266, 17
          %v326 = vpop.permute.xlu0 %325
          %327 = vrot.lane.b32.xlu0 %v267, 17
          %v328 = vpop.permute.xlu0 %327
          %vm329 = vcmp.ge.s32.totalorder %v322, 1
          %vm330 = vcmp.ge.s32.totalorder %v324, 1
          %vm331 = vmand %vm329, %vm330
          %v332 = vsel %vm331, %v326, 0.0
          %v333 = vsel %vm331, %v328, 0.0
          %v334 = vstv %s268
          %v335 = vmul.f32 %v334, %v332
          %v336 = vstv %s295
          %v337 = vmul.f32 %v336, %v333
          %v338 = vadd.f32 %v335, %v337
          %v339 = vstv %s277
          %v340 = vmul.f32 %v339, %v332
          %v341 = vstv %s304
          %v342 = vmul.f32 %v341, %v333
          %v343 = vadd.f32 %v340, %v342
          %v344 = vstv %s286
          %v345 = vmul.f32 %v344, %v332
          %v346 = vstv %s313
          %v347 = vmul.f32 %v346, %v333
          %v348 = vadd.f32 %v345, %v347
          %349 = vrot.lane.b32.xlu0 %v266, 16
          %v350 = vpop.permute.xlu0 %349
          %351 = vrot.lane.b32.xlu0 %v267, 16
          %v352 = vpop.permute.xlu0 %351
          %v353 = vsel %vm329, %v350, 0.0
          %v354 = vsel %vm329, %v352, 0.0
          %v355 = vstv %s269
          %v356 = vmul.f32 %v355, %v353
          %v357 = vstv %s296
          %v358 = vmul.f32 %v357, %v354
          %v359 = vadd.f32 %v356, %v358
          %v360 = vadd.f32 %v338, %v359
          %v361 = vstv %s278
          %v362 = vmul.f32 %v361, %v353
          %v363 = vstv %s305
          %v364 = vmul.f32 %v363, %v354
          %v365 = vadd.f32 %v362, %v364
          %v366 = vadd.f32 %v343, %v365
          %v367 = vstv %s287
          %v368 = vmul.f32 %v367, %v353
          %v369 = vstv %s314
          %v370 = vmul.f32 %v369, %v354
          %v371 = vadd.f32 %v368, %v370
          %v372 = vadd.f32 %v348, %v371
          %373 = vrot.lane.b32.xlu0 %v266, 15
          %v374 = vpop.permute.xlu0 %373
          %375 = vrot.lane.b32.xlu0 %v267, 15
          %v376 = vpop.permute.xlu0 %375
          %vm377 = vcmp.le.s32.totalorder %v324, 14
          %vm378 = vmand %vm329, %vm377
          %v379 = vsel %vm378, %v374, 0.0
          %v380 = vsel %vm378, %v376, 0.0
          %v381 = vstv %s270
          %v382 = vmul.f32 %v381, %v379
          %v383 = vstv %s297
          %v384 = vmul.f32 %v383, %v380
          %v385 = vadd.f32 %v382, %v384
          %v386 = vadd.f32 %v360, %v385
          %v387 = vstv %s279
          %v388 = vmul.f32 %v387, %v379
          %v389 = vstv %s306
          %v390 = vmul.f32 %v389, %v380
          %v391 = vadd.f32 %v388, %v390
          %v392 = vadd.f32 %v366, %v391
          %v393 = vstv %s288
          %v394 = vmul.f32 %v393, %v379
          %v395 = vstv %s315
          %v396 = vmul.f32 %v395, %v380
          %v397 = vadd.f32 %v394, %v396
          %v398 = vadd.f32 %v372, %v397
          %399 = vrot.lane.b32.xlu0 %v266, 1
          %v400 = vpop.permute.xlu0 %399
          %401 = vrot.lane.b32.xlu0 %v267, 1
          %v402 = vpop.permute.xlu0 %401
          %v403 = vsel %vm330, %v400, 0.0
          %v404 = vsel %vm330, %v402, 0.0
          %v405 = vstv %s271
          %v406 = vmul.f32 %v405, %v403
          %v407 = vstv %s298
          %v408 = vmul.f32 %v407, %v404
          %v409 = vadd.f32 %v406, %v408
          %v410 = vadd.f32 %v386, %v409
          %v411 = vstv %s280
          %v412 = vmul.f32 %v411, %v403
          %v413 = vstv %s307
          %v414 = vmul.f32 %v413, %v404
          %v415 = vadd.f32 %v412, %v414
          %v416 = vadd.f32 %v392, %v415
          %v417 = vstv %s289
          %v418 = vmul.f32 %v417, %v403
          %v419 = vstv %s316
          %v420 = vmul.f32 %v419, %v404
          %v421 = vadd.f32 %v418, %v420
          %v422 = vadd.f32 %v398, %v421
          %v423 = vstv %s272
          %v424 = vmul.f32 %v423, %v266
          %v425 = vstv %s299
          %v426 = vmul.f32 %v425, %v267
          %v427 = vadd.f32 %v424, %v426
          %v428 = vadd.f32 %v410, %v427
          %v429 = vstv %s281
          %v430 = vmul.f32 %v429, %v266
          %v431 = vstv %s308
          %v432 = vmul.f32 %v431, %v267
          %v433 = vadd.f32 %v430, %v432
          %v434 = vadd.f32 %v416, %v433
          %v435 = vstv %s290
          %v436 = vmul.f32 %v435, %v266
          %v437 = vstv %s317
          %v438 = vmul.f32 %v437, %v267
          %v439 = vadd.f32 %v436, %v438
          %v440 = vadd.f32 %v422, %v439
          %441 = vrot.lane.b32.xlu0 %v266, 127
          %v442 = vpop.permute.xlu0 %441
          %443 = vrot.lane.b32.xlu0 %v267, 127
          %v444 = vpop.permute.xlu0 %443
          %v445 = vsel %vm377, %v442, 0.0
          %v446 = vsel %vm377, %v444, 0.0
          %v447 = vstv %s273
          %v448 = vmul.f32 %v447, %v445
          %v449 = vstv %s300
          %v450 = vmul.f32 %v449, %v446
          %v451 = vadd.f32 %v448, %v450
          %v452 = vadd.f32 %v428, %v451
          %v453 = vstv %s282
          %v454 = vmul.f32 %v453, %v445
          %v455 = vstv %s309
          %v456 = vmul.f32 %v455, %v446
          %v457 = vadd.f32 %v454, %v456
          %v458 = vadd.f32 %v434, %v457
          %v459 = vstv %s291
          %v460 = vmul.f32 %v459, %v445
          %v461 = vstv %s318
          %v462 = vmul.f32 %v461, %v446
          %v463 = vadd.f32 %v460, %v462
          %v464 = vadd.f32 %v440, %v463
          %465 = vrot.lane.b32.xlu0 %v266, 113
          %v466 = vpop.permute.xlu0 %465
          %467 = vrot.lane.b32.xlu0 %v267, 113
          %v468 = vpop.permute.xlu0 %467
          %vm469 = vcmp.le.s32.totalorder %v322, 6
          %vm470 = vmand %vm469, %vm330
          %v471 = vsel %vm470, %v466, 0.0
          %v472 = vsel %vm470, %v468, 0.0
          %v473 = vstv %s274
          %v474 = vmul.f32 %v473, %v471
          %v475 = vstv %s301
          %v476 = vmul.f32 %v475, %v472
          %v477 = vadd.f32 %v474, %v476
          %v478 = vadd.f32 %v452, %v477
          %v479 = vstv %s283
          %v480 = vmul.f32 %v479, %v471
          %v481 = vstv %s310
          %v482 = vmul.f32 %v481, %v472
          %v483 = vadd.f32 %v480, %v482
          %v484 = vadd.f32 %v458, %v483
          %v485 = vstv %s292
          %v486 = vmul.f32 %v485, %v471
          %v487 = vstv %s319
          %v488 = vmul.f32 %v487, %v472
          %v489 = vadd.f32 %v486, %v488
          %v490 = vadd.f32 %v464, %v489
          %491 = vrot.lane.b32.xlu0 %v266, 112
          %v492 = vpop.permute.xlu0 %491
          %493 = vrot.lane.b32.xlu0 %v267, 112
          %v494 = vpop.permute.xlu0 %493
          %v495 = vsel %vm469, %v492, 0.0
          %v496 = vsel %vm469, %v494, 0.0
          %v497 = vstv %s275
          %v498 = vmul.f32 %v497, %v495
          %v499 = vstv %s302
          %v500 = vmul.f32 %v499, %v496
          %v501 = vadd.f32 %v498, %v500
          %v502 = vadd.f32 %v478, %v501
          %v503 = vstv %s284
          %v504 = vmul.f32 %v503, %v495
          %v505 = vstv %s311
          %v506 = vmul.f32 %v505, %v496
          %v507 = vadd.f32 %v504, %v506
          %v508 = vadd.f32 %v484, %v507
          %v509 = vstv %s293
          %v510 = vmul.f32 %v509, %v495
          %v511 = vstv %s320
          %v512 = vmul.f32 %v511, %v496
          %v513 = vadd.f32 %v510, %v512
          %v514 = vadd.f32 %v490, %v513
          %515 = vrot.lane.b32.xlu0 %v266, 111
          %v516 = vpop.permute.xlu0 %515
          %517 = vrot.lane.b32.xlu0 %v267, 111
          %v518 = vpop.permute.xlu0 %517
          %vm519 = vmand %vm469, %vm377
          %v520 = vsel %vm519, %v516, 0.0
          %v521 = vsel %vm519, %v518, 0.0
          %v522 = vstv %s276
          %v523 = vmul.f32 %v522, %v520
          %v524 = vstv %s303
          %v525 = vmul.f32 %v524, %v521
          %v526 = vadd.f32 %v523, %v525
          %v527 = vadd.f32 %v502, %v526
          %v528 = vstv %s285
          %v529 = vmul.f32 %v528, %v520
          %v530 = vstv %s312
          %v531 = vmul.f32 %v530, %v521
          %v532 = vadd.f32 %v529, %v531
          %v533 = vadd.f32 %v508, %v532
          %v534 = vstv %s294
          %v535 = vmul.f32 %v534, %v520
          %v536 = vstv %s321
          %v537 = vmul.f32 %v536, %v521
          %v538 = vadd.f32 %v535, %v537
          %v539 = vadd.f32 %v514, %v538
          %v540 = vlaneseq
          %v541 = vshrl.u32 %v540, 7
          %v542 = vrot.slane %v527, 7
          %vm543 = vcmp.ge.s32.totalorder %v541, 1
          %v544 = vsel %vm543, %v542, 0.0
          %v545 = vadd.f32 %v533, %v544
          %v546 = vrot.slane %v539, 1
          %vm547 = vcmp.le.s32.totalorder %v541, 6
          %v548 = vsel %vm547, %v546, 0.0
          %v549 = vadd.f32 %v545, %v548
          %v550 = vxor.u32 %v549, 2147483648
          %v551 = vmul.f32 %v550, 1.442695
          %v552 = vpow.pop %v551
          %v553 = vadd.f32 %v552, 1.0
          %v554 = vrcp.pop %v553
          %v555 = vmul.f32 1.0, %v554
          %556 = vst [vmem:[%s231] sm:$0xff] %v555
        $region56: #{tpu_custom_call.1} parent=31 // pred_fallthru
          _
        %s557 = sand.u32 %s112, 1
        %s558 = scalar_lea.sflag [#allocation6], %s557
        %s559 = sand.u32 %s112, 1
        %s560 = smul.addr %s559, 8
        %s561 = scalar_lea.vmem [#allocation11], %s560
        // Predicated region
        $region57: #{tpu_custom_call.1} parent=31 // pred_check
          %p562 = pneg %p122
        $region58: #{tpu_custom_call.1} parent=31 // pred_check_branch
          %564 = sbr.rel (%p562) target = $region60
        $region59: #{tpu_custom_call.1} parent=31 // pred_region
          %s566 = ssub.s32 128, 128
          %567 = vsyncadd %s558, %s566
          %s568 = smul.addr %s26, 128
          %s569 = scalar_lea.hbm %s3, %s568
          %s571 = sshll.u32 %s561, 4
          %s572 = int_to_ptr.vmem [resolvable:$true] %s571
          %574 = dma.vmem_to_hbm [thread:$0]  %s572, 128, %s569, %s558
        $region60: #{tpu_custom_call.1} parent=31 // pred_fallthru
          _
      $region32: #{tpu_custom_call.1} parent=5 // pred_fallthru
        _
      %p575 = scmp.le.s32.totalorder 2, %s17
      // Predicated region
      $region61: #{tpu_custom_call.1} parent=5 // pred_check
        %p576 = pneg %p575
      $region62: #{tpu_custom_call.1} parent=5 // pred_check_branch
        %578 = sbr.rel (%p576) target = $region64
      $region63: #{tpu_custom_call.1} parent=5 // pred_region
        %s579 = ssub.s32 %s17, 2
        // Predicated region
        $region65: #{tpu_custom_call.1} parent=63 // pred_check
          %p580 = pneg %p128
        $region66: #{tpu_custom_call.1} parent=63 // pred_check_branch
          %582 = sbr.rel (%p580) target = $region68
        $region67: #{tpu_custom_call.1} parent=63 // pred_region
          %s583 = sand.u32 %s113, 1
          %s584 = scalar_lea.sflag [#allocation6], %s583
          %s585 = sand.u32 %s113, 1
          %s586 = smul.addr %s585, 8
          %s587 = scalar_lea.vmem [#allocation11], %s586
          %588 = dma.done %s584, 128
        $region68: #{tpu_custom_call.1} parent=63 // pred_fallthru
          _
      $region64: #{tpu_custom_call.1} parent=5 // pred_fallthru
        _
    $region6: #{tpu_custom_call.1} parent=1 // loop_footer
      %s21 = sadd.s32 1, %s17
    $region7: #{tpu_custom_call.1} parent=1 // loop_footer_branch
      %16 = sbr.rel target = $region3
    $region8: #{tpu_custom_call.1} parent=1 // loop_exit
      _
    %589 = vsyncpa [#allocation5], 1
    %s590 = scalar_lea.sflag [#allocation5], 1
    %591 = vsyncpa %s590, 1
    %592 = vsyncpa [#allocation10], 1
    %s593 = scalar_lea.sflag [#allocation10], 1
    %594 = vsyncpa %s593, 1
    %595 = vsyncpa [#allocation6], 1
    %s596 = scalar_lea.sflag [#allocation6], 1
    %597 = vsyncpa %s596, 1
    %598 = vsyncpa [#allocation7], 1
    %s599 = scalar_lea.sflag [#allocation7], 1
    %600 = vsyncpa %s599, 1

</llo_original>
